<compile_context>
chip_gen: v7x
topology: tpu7x:2x2x1
jax: 0.10.0
libtpu: 0.0.40
codegen_flags: <defaults>
</compile_context>

<pallas_src>
import functools

import jax
import jax.numpy as jnp
import numpy as np
from jax.experimental import pallas as pl
from jax.experimental.pallas import tpu as pltpu


def drillnet_kernel(x_ref, wconv_ref, bcf_ref, w1_ref, b1_ref, w2_ref, b2_ref, o_ref):
    # x_ref    : (TB, C_in*D)        VMEM  bf16 lane-packed input
    # wconv_ref: (C_in*D, C_out*D)   VMEM  bf16 conv expressed as dense matmul
    # bcf_ref  : (1, C_out*D)        VMEM  f32 conv bias, flattened oc*D+d
    # w1_ref   : (C_out*D, H1)       VMEM  bf16 fc1 weight (transposed)
    # b1_ref   : (1, H1)             VMEM  f32
    # w2_ref   : (1, H1)             VMEM  f32 fc2 weight row
    # b2_ref   : (1,)                SMEM  f32
    # o_ref    : (1, TB)             VMEM  f32 lane-dense per-row results

    # conv(3x3, pad=1, H==1) + bias + ReLU as one full-width MXU matmul (f32 acc).
    conv = jnp.dot(x_ref[...], wconv_ref[...], preferred_element_type=jnp.float32)
    conv = jnp.maximum(conv + bcf_ref[...], 0.0)           # (TB, C_out*D) f32

    # fc1 + ReLU: cast activation to bf16 only at the MXU input, accumulate f32.
    h1 = jnp.dot(conv.astype(w1_ref.dtype), w1_ref[...],
                 preferred_element_type=jnp.float32)
    h1 = jnp.maximum(h1 + b1_ref[...], 0.0)                # (TB, H1) f32

    # fc2 (N == 1): VPU multiply + XLU lane reduction (keep MXU free), then
    # lay the per-row sums along lanes for a lane-dense (1, TB) store.
    s = jnp.sum(h1 * w2_ref[...], axis=-1)                 # (TB,) f32
    o_ref[...] = s[None, :] + b2_ref[0]


def _fold_conv_to_matmul(wc, bc, D):
    """Fold the (H==1, pad=1) 3x3 conv into y_flat = x_flat @ M + b_flat.

    Flatten orders: x_flat index = ic*D + din, y_flat index = oc*D + dout
    (matching torch's .view(B, C*H*W)). Only the middle kernel row (kh == 1)
    contributes since rows 0/2 only ever see the zero H-padding.
    """
    wc = np.asarray(wc, dtype=np.float32)
    bc = np.asarray(bc, dtype=np.float32)
    C_out, C_in, KH, KW = wc.shape
    wcm = wc[:, :, KH // 2, :]                      # (C_out, C_in, KW)
    din = np.arange(D)[:, None]
    dout = np.arange(D)[None, :]
    delta = din - dout + (KW // 2)                  # tap index kw for (din, dout)
    valid = (delta >= 0) & (delta < KW)             # out-of-range taps hit zero pad
    delta_c = np.clip(delta, 0, KW - 1)
    taps = wcm[:, :, delta_c]                       # (C_out, C_in, D, D)
    taps = np.where(valid[None, None], taps, 0.0)
    M = np.transpose(taps, (1, 2, 0, 3)).reshape(C_in * D, C_out * D)
    b_flat = np.repeat(bc, D)[None, :]              # (1, C_out*D), index oc*D + d
    return M, b_flat


def prepare_drillnet_params(wc, bc, w1, b1, w2, b2, D):
    """One-time (hoisted) weight prep: conv fold, transpose, bf16 casts."""
    M, b_flat = _fold_conv_to_matmul(wc, bc, D)
    H1 = np.asarray(w1).shape[0]
    return (
        jnp.asarray(M, dtype=jnp.bfloat16),                        # wconv (CinD, F1)
        jnp.asarray(b_flat, dtype=jnp.float32),                    # bcf   (1, F1)
        jnp.asarray(np.asarray(w1, np.float32).T, jnp.bfloat16),   # w1_t  (F1, H1)
        jnp.asarray(np.asarray(b1, np.float32).reshape(1, H1)),    # b1    (1, H1)
        jnp.asarray(np.asarray(w2, np.float32).reshape(1, H1)),    # w2    (1, H1)
        jnp.asarray(np.asarray(b2, np.float32).reshape(1,)),       # b2    (1,)
    )


@jax.jit
def drillnet_forward(x4d, wconv, bcf, w1t, b1r, w2r, b2):
    """x4d: (B, C_in, 1, D) f32 (NCHW). Returns (B, 1) f32."""
    B, C_in, H, D = x4d.shape
    assert H == 1, "DrillNet inputs have a singleton H axis"
    CinD, F1 = wconv.shape
    H1 = w1t.shape[1]
    assert C_in * D == CinD

    # Fill the MXU M-dimension: one grid step for small batches; cap the tile
    # at 256 rows (v6e/v7x MXU) for large batches, which also yields a grid of
    # length >= 2 so the "parallel" axis shards across v7x's two TensorCores.
    tb = B if B <= 256 else 256
    assert B % tb == 0, "ragged batches unsupported"
    # TODO(synk): ragged batches (B % tb != 0) would need pl.cdiv + tail masking.
    assert tb % 16 == 0, "bf16 sublane tiling needs tb to be a multiple of 16"

    x_flat = x4d.reshape(B, CinD).astype(jnp.bfloat16)   # lane-packed bf16 input

    cost = pl.CostEstimate(
        flops=2 * B * CinD * F1 + 2 * B * F1 * H1 + 2 * B * H1,
        transcendentals=0,
        bytes_accessed=(B * CinD * 2 + CinD * F1 * 2 + F1 * H1 * 2
                        + F1 * 4 + 2 * H1 * 4 + 4 + B * 4),
    )

    keep1 = pl.Buffered(1)   # grid-invariant operands: no double-buffering
    out = pl.pallas_call(
        drillnet_kernel,
        out_shape=jax.ShapeDtypeStruct((1, B), jnp.float32),
        grid=(B // tb,),
        in_specs=[
            pl.BlockSpec((tb, CinD), lambda i: (i, 0)),
            pl.BlockSpec((CinD, F1), lambda i: (0, 0), pipeline_mode=keep1),
            pl.BlockSpec((1, F1), lambda i: (0, 0), pipeline_mode=keep1),
            pl.BlockSpec((F1, H1), lambda i: (0, 0), pipeline_mode=keep1),
            pl.BlockSpec((1, H1), lambda i: (0, 0), pipeline_mode=keep1),
            pl.BlockSpec((1, H1), lambda i: (0, 0), pipeline_mode=keep1),
            pl.BlockSpec(memory_space=pltpu.MemorySpace.SMEM),
        ],
        out_specs=pl.BlockSpec((1, tb), lambda i: (0, i)),
        compiler_params=pltpu.CompilerParams(dimension_semantics=("parallel",)),
        cost_estimate=cost,
    )(x_flat, wconv, bcf, w1t, b1r, w2r, b2)
    return out.reshape(B, 1)


def reference_forward(x4d, wc, bc, w1, b1, w2, b2):
    """Pure-JAX reference matching the PyTorch forward (f32 ground truth)."""
    hp = jax.lax.Precision.HIGHEST
    y = jax.lax.conv_general_dilated(
        x4d, wc, window_strides=(1, 1), padding=((1, 1), (1, 1)),
        dimension_numbers=("NCHW", "OIHW", "NCHW"), precision=hp)
    y = y + bc[None, :, None, None]
    y = jax.nn.relu(y)
    y = y.reshape(y.shape[0], -1)
    y = jax.nn.relu(jnp.dot(y, w1.T, precision=hp) + b1)
    return jnp.dot(y, w2.T, precision=hp) + b2


if __name__ == "__main__":
    # args: input_shape=(4, 32), first_out_channels=8, kernel_size=3
    B, C_in, D = 16, 4, 32
    C_out, K = 8, 3
    FC1_IN = C_out * D            # 256
    H1 = FC1_IN // 2              # 128

    key = jax.random.PRNGKey(0)
    ks = jax.random.split(key, 7)
    # Deterministic xavier_normal_-style init (shapes match nn.Conv2d / nn.Linear).
    wc = jax.random.normal(ks[0], (C_out, C_in, K, K), jnp.float32) * np.float32(
        np.sqrt(2.0 / (C_in * K * K + C_out * K * K)))
    bc = jax.random.normal(ks[1], (C_out,), jnp.float32) * 0.05
    w1 = jax.random.normal(ks[2], (H1, FC1_IN), jnp.float32) * np.float32(
        np.sqrt(2.0 / (FC1_IN + H1)))
    b1 = jax.random.normal(ks[3], (H1,), jnp.float32) * 0.05
    w2 = jax.random.normal(ks[4], (1, H1), jnp.float32) * np.float32(
        np.sqrt(2.0 / (H1 + 1)))
    b2 = jax.random.normal(ks[5], (1,), jnp.float32) * 0.05
    x = jax.random.normal(ks[6], (B, C_in, 1, D), jnp.float32)

    # One-time weight prep (hoisted out of the per-call path).
    params = prepare_drillnet_params(wc, bc, w1, b1, w2, b2, D)

    out = jax.block_until_ready(drillnet_forward(x, *params))
    assert out.shape == (B, 1)

    ref = reference_forward(x, wc, bc, w1, b1, w2, b2)
    # Kernel feeds the MXU with bf16 operands (default single-pass MXU
    # precision); reference is f32 HIGHEST ground truth, so allow bf16-level
    # tolerance.
    np.testing.assert_allclose(np.asarray(out), np.asarray(ref), atol=2e-2, rtol=2e-2)
    print("KERNEL_OK")
</pallas_src>

<mosaic_0001>
module attributes {stable_mosaic.version = 11 : i64} {
  func.func @drillnet_kernel(%arg0: i32, %arg1: memref<16x128xbf16, #tpu.memory_space<vmem>>, %arg2: memref<128x256xbf16, #tpu.memory_space<vmem>>, %arg3: memref<1x256xf32, #tpu.memory_space<vmem>>, %arg4: memref<256x128xbf16, #tpu.memory_space<vmem>>, %arg5: memref<1x128xf32, #tpu.memory_space<vmem>>, %arg6: memref<1x128xf32, #tpu.memory_space<vmem>>, %arg7: memref<1xf32, #tpu.memory_space<smem>>, %arg8: memref<1x16xf32, #tpu.memory_space<vmem>>) attributes {dimension_semantics = [#tpu.dimension_semantics<parallel>], iteration_bounds = array<i64: 1>, scalar_prefetch = 0 : i64, scratch_operands = 0 : i64, tpu.core_type = #tpu.core_type<tc>, window_params = [{transform_indices = @transform_0, window_bounds = array<i64: 16, 128>}, {pipeline_mode = #tpu.pipeline_mode<synchronous>, transform_indices = @transform_1, window_bounds = array<i64: 128, 256>}, {pipeline_mode = #tpu.pipeline_mode<synchronous>, transform_indices = @transform_2, window_bounds = array<i64: 1, 256>}, {pipeline_mode = #tpu.pipeline_mode<synchronous>, transform_indices = @transform_3, window_bounds = array<i64: 256, 128>}, {pipeline_mode = #tpu.pipeline_mode<synchronous>, transform_indices = @transform_4, window_bounds = array<i64: 1, 128>}, {pipeline_mode = #tpu.pipeline_mode<synchronous>, transform_indices = @transform_5, window_bounds = array<i64: 1, 128>}, {transform_indices = @transform_6, window_bounds = array<i64: 1>}, {transform_indices = @transform_7, window_bounds = array<i64: 1, 16>}]} {
    %c0 = arith.constant 0 : index
    %c0_0 = arith.constant 0 : index
    %0 = vector.load %arg1[%c0, %c0_0] : memref<16x128xbf16, #tpu.memory_space<vmem>>, vector<16x128xbf16>
    %c0_1 = arith.constant 0 : index
    %c0_2 = arith.constant 0 : index
    %1 = vector.load %arg2[%c0_1, %c0_2] : memref<128x256xbf16, #tpu.memory_space<vmem>>, vector<128x256xbf16>
    %cst = arith.constant dense<0.000000e+00> : vector<16x256xf32>
    %2 = tpu.matmul %0, %1, %cst {dimension_numbers = #tpu.dot_dimension_numbers<[1], [0], [0], [1], [0, 0, 1, 1], [], []>} : vector<16x128xbf16>, vector<128x256xbf16>, vector<16x256xf32> -> vector<16x256xf32>
    %c0_3 = arith.constant 0 : index
    %c0_4 = arith.constant 0 : index
    %3 = vector.load %arg3[%c0_3, %c0_4] : memref<1x256xf32, #tpu.memory_space<vmem>>, vector<1x256xf32>
    %4 = vector.broadcast %3 : vector<1x256xf32> to vector<16x256xf32>
    %5 = arith.addf %2, %4 : vector<16x256xf32>
    %cst_5 = arith.constant 0.000000e+00 : f32
    %6 = vector.broadcast %cst_5 : f32 to vector<16x256xf32>
    %7 = arith.maximumf %5, %6 : vector<16x256xf32>
    %8 = arith.truncf %7 : vector<16x256xf32> to vector<16x256xbf16>
    %c0_6 = arith.constant 0 : index
    %c0_7 = arith.constant 0 : index
    %9 = vector.load %arg4[%c0_6, %c0_7] : memref<256x128xbf16, #tpu.memory_space<vmem>>, vector<256x128xbf16>
    %cst_8 = arith.constant dense<0.000000e+00> : vector<16x128xf32>
    %10 = tpu.matmul %8, %9, %cst_8 {dimension_numbers = #tpu.dot_dimension_numbers<[1], [0], [0], [1], [0, 0, 1, 1], [], []>} : vector<16x256xbf16>, vector<256x128xbf16>, vector<16x128xf32> -> vector<16x128xf32>
    %c0_9 = arith.constant 0 : index
    %c0_10 = arith.constant 0 : index
    %11 = vector.load %arg5[%c0_9, %c0_10] : memref<1x128xf32, #tpu.memory_space<vmem>>, vector<1x128xf32>
    %12 = vector.broadcast %11 : vector<1x128xf32> to vector<16x128xf32>
    %13 = arith.addf %10, %12 : vector<16x128xf32>
    %cst_11 = arith.constant 0.000000e+00 : f32
    %14 = vector.broadcast %cst_11 : f32 to vector<16x128xf32>
    %15 = arith.maximumf %13, %14 : vector<16x128xf32>
    %c0_12 = arith.constant 0 : index
    %c0_13 = arith.constant 0 : index
    %16 = vector.load %arg6[%c0_12, %c0_13] : memref<1x128xf32, #tpu.memory_space<vmem>>, vector<1x128xf32>
    %17 = vector.broadcast %16 : vector<1x128xf32> to vector<16x128xf32>
    %18 = arith.mulf %15, %17 : vector<16x128xf32>
    %cst_14 = arith.constant dense<0.000000e+00> : vector<16xf32>
    %19 = vector.multi_reduction <add>, %18, %cst_14 [1] : vector<16x128xf32> to vector<16xf32>
    %20 = vector.shape_cast %19 : vector<16xf32> to vector<1x16xf32>
    %c0_15 = arith.constant 0 : index
    %21 = memref.load %arg7[%c0_15] : memref<1xf32, #tpu.memory_space<smem>>
    %22 = vector.broadcast %21 : f32 to vector<1x16xf32>
    %23 = arith.addf %20, %22 : vector<1x16xf32>
    %c0_16 = arith.constant 0 : index
    %c0_17 = arith.constant 0 : index
    %24 = vector.load %arg8[%c0_16, %c0_17] : memref<1x16xf32, #tpu.memory_space<vmem>>, vector<1x16xf32>
    tpu.vector_store %arg8[%c0_16, %c0_17], %23 {strides = array<i32>} : memref<1x16xf32, #tpu.memory_space<vmem>>, vector<1x16xf32>,
    return
  }
  func.func @transform_0(%arg0: i32) -> (i32, i32) {
    %c0_i32 = arith.constant 0 : i32
    %c0_i32_0 = arith.constant 0 : i32
    return %arg0, %c0_i32 : i32, i32
  }
  func.func @transform_1(%arg0: i32) -> (i32, i32) {
    %c0_i32 = arith.constant 0 : i32
    %c0_i32_0 = arith.constant 0 : i32
    %c0_i32_1 = arith.constant 0 : i32
    return %c0_i32, %c0_i32_0 : i32, i32
  }
  func.func @transform_2(%arg0: i32) -> (i32, i32) {
    %c0_i32 = arith.constant 0 : i32
    %c0_i32_0 = arith.constant 0 : i32
    %c0_i32_1 = arith.constant 0 : i32
    return %c0_i32, %c0_i32_0 : i32, i32
  }
  func.func @transform_3(%arg0: i32) -> (i32, i32) {
    %c0_i32 = arith.constant 0 : i32
    %c0_i32_0 = arith.constant 0 : i32
    %c0_i32_1 = arith.constant 0 : i32
    return %c0_i32, %c0_i32_0 : i32, i32
  }
  func.func @transform_4(%arg0: i32) -> (i32, i32) {
    %c0_i32 = arith.constant 0 : i32
    %c0_i32_0 = arith.constant 0 : i32
    %c0_i32_1 = arith.constant 0 : i32
    return %c0_i32, %c0_i32_0 : i32, i32
  }
  func.func @transform_5(%arg0: i32) -> (i32, i32) {
    %c0_i32 = arith.constant 0 : i32
    %c0_i32_0 = arith.constant 0 : i32
    %c0_i32_1 = arith.constant 0 : i32
    return %c0_i32, %c0_i32_0 : i32, i32
  }
  func.func @transform_6(%arg0: i32) -> i32 {
    %c0_i32 = arith.constant 0 : i32
    %c0_i32_0 = arith.constant 0 : i32
    return %c0_i32 : i32
  }
  func.func @transform_7(%arg0: i32) -> (i32, i32) {
    %c0_i32 = arith.constant 0 : i32
    %c0_i32_0 = arith.constant 0 : i32
    return %c0_i32, %arg0 : i32, i32
  }
}

</mosaic_0001>

<llo_original>
// kernel: drillnet_forward.1
$region0: #{drillnet_forward.1}
  #allocation0 [shape = 'u32[]', space=smem, size = 0x4, offset = 0x4, fixed_abs, tag = 'smem constant byte address 0x4 - core index']
  #allocation1 [shape = 'u32[144,128]{1,0:T(1,128)}', space=vmem, size = 0x12000, scoped, tag = 'internal scratch']
  #allocation2 [shape = 'f32[1]{0:T(128)S(6)}', space=smem, size = 0x200, scoped, tag = 'scoped memory for drillnet_forward.1']
  %s0 = inlined_call_operand.vmem [shape: bf16[16,128], index: 0, kind: input, shape index: {}]
  %s1 = inlined_call_operand.vmem [shape: bf16[128,256], index: 1, kind: input, shape index: {}]
  %s2 = inlined_call_operand.vmem [shape: f32[1,256], index: 2, kind: input, shape index: {}]
  %s3 = inlined_call_operand.hbm [shape: bf16[256,128], index: 3, kind: input, shape index: {}]
  %s4 = inlined_call_operand.vmem [shape: f32[1,128], index: 4, kind: input, shape index: {}]
  %s5 = inlined_call_operand.vmem [shape: f32[1,128], index: 5, kind: input, shape index: {}]
  %s6 = inlined_call_operand.<no memory space> [shape: f32[1], index: 6, kind: input, shape index: {}]
  %s7 = inlined_call_operand.hbm [shape: f32[1,16], index: 7, kind: output, shape index: {}]
  %s8 = sld [smem:[#allocation0]]
  $region42: #{drillnet_forward.1} parent=0
    _
  %s10 = ssub.s32 1, %s8
  %s11 = scalar_select 0, %s10, %s8
  %12 = sst [smem:[#allocation2]] %s6
  $region1: #{drillnet_forward.1} parent=0
    #allocation3 [shape = 'u8[65536]{0}', space=vmem, size = 0x10000, scoped, tag = 'input window, operand 3, single buffered']
    #allocation4 [shape = 's32[1]{0}', space=sflag, size = 0x4, scoped, tag = 'scoped memory for drillnet_forward.1']
    #allocation5 [shape = 's32[1]{0}', space=sflag, size = 0x4, scoped, tag = 'scoped memory for drillnet_forward.1']
    #allocation6 [shape = 'u8[512]{0}', space=vmem, size = 0x400, scoped, tag = 'output window, operand 0, single buffered']
    %13 = vsyncpa [#allocation4], 0
    %14 = vsyncpa [#allocation5], 0
    // Predicated region
    $region2: #{drillnet_forward.1} parent=1 // pred_check
      _
    $region3: #{drillnet_forward.1} parent=1 // pred_check_branch
      %16 = sbr.rel (0) target = $region5
    $region4: #{drillnet_forward.1} parent=1 // pred_region
      _
    $region5: #{drillnet_forward.1} parent=1 // pred_fallthru
      _
    // Predicated region
    $region6: #{drillnet_forward.1} parent=1 // pred_check
      _
    $region7: #{drillnet_forward.1} parent=1 // pred_check_branch
      %18 = sbr.rel (0) target = $region9
    $region8: #{drillnet_forward.1} parent=1 // pred_region
      _
    $region9: #{drillnet_forward.1} parent=1 // pred_fallthru
      _
    // Predicated region
    $region10: #{drillnet_forward.1} parent=1 // pred_check
      _
    $region11: #{drillnet_forward.1} parent=1 // pred_check_branch
      %20 = sbr.rel (0) target = $region13
    $region12: #{drillnet_forward.1} parent=1 // pred_region
      _
    $region13: #{drillnet_forward.1} parent=1 // pred_fallthru
      _
    // Predicated region
    $region14: #{drillnet_forward.1} parent=1 // pred_check
      _
    $region15: #{drillnet_forward.1} parent=1 // pred_check_branch
      %22 = sbr.rel (0) target = $region17
    $region16: #{drillnet_forward.1} parent=1 // pred_region
      %s24 = ssub.s32 2048, 2048
      %25 = vsyncadd [#allocation4], %s24
      %s26 = sshll.u32 [#allocation3], 4
      %s27 = int_to_ptr.vmem [resolvable:$true] %s26
      %32 = dma.hbm_to_vmem [thread:$0]  %s3, 2048, %s27, [#allocation4], 64, 64, 4
    $region17: #{drillnet_forward.1} parent=1 // pred_fallthru
      _
    // Predicated region
    $region18: #{drillnet_forward.1} parent=1 // pred_check
      _
    $region19: #{drillnet_forward.1} parent=1 // pred_check_branch
      %34 = sbr.rel (0) target = $region21
    $region20: #{drillnet_forward.1} parent=1 // pred_region
      _
    $region21: #{drillnet_forward.1} parent=1 // pred_fallthru
      _
    // Predicated region
    $region22: #{drillnet_forward.1} parent=1 // pred_check
      _
    $region23: #{drillnet_forward.1} parent=1 // pred_check_branch
      %36 = sbr.rel (0) target = $region25
    $region24: #{drillnet_forward.1} parent=1 // pred_region
      _
    $region25: #{drillnet_forward.1} parent=1 // pred_fallthru
      _
    // Predicated region
    $region26: #{drillnet_forward.1} parent=1 // pred_check
      _
    $region27: #{drillnet_forward.1} parent=1 // pred_check_branch
      %38 = sbr.rel (0) target = $region29
    $region28: #{drillnet_forward.1} parent=1 // pred_region
      _
    $region29: #{drillnet_forward.1} parent=1 // pred_fallthru
      _
    // Predicated region
    $region30: #{drillnet_forward.1} parent=1 // pred_check
      _
    $region31: #{drillnet_forward.1} parent=1 // pred_check_branch
      %40 = sbr.rel (0) target = $region33
    $region32: #{drillnet_forward.1} parent=1 // pred_region
      %41 = dma.done [#allocation4], 2048
    $region33: #{drillnet_forward.1} parent=1 // pred_fallthru
      _
    %v43 = vld [vmem:[%s0] sm:$0xf]
    %v44 = vld [vmem:[%s0 + $0x4] sm:$0xf]
    %v45 = vld [vmem:[%s1] sm:$0xff]
    %v46 = vld [vmem:[%s1 + $0x8] sm:$0xff]
    %v47 = vld [vmem:[%s1 + $0x10] sm:$0xff]
    %v48 = vld [vmem:[%s1 + $0x18] sm:$0xff]
    %v49 = vld [vmem:[%s1 + $0x20] sm:$0xff]
    %v50 = vld [vmem:[%s1 + $0x28] sm:$0xff]
    %v51 = vld [vmem:[%s1 + $0x30] sm:$0xff]
    %v52 = vld [vmem:[%s1 + $0x38] sm:$0xff]
    %v53 = vld [vmem:[%s1 + $0x40] sm:$0xff]
    %v54 = vld [vmem:[%s1 + $0x48] sm:$0xff]
    %v55 = vld [vmem:[%s1 + $0x50] sm:$0xff]
    %v56 = vld [vmem:[%s1 + $0x58] sm:$0xff]
    %v57 = vld [vmem:[%s1 + $0x60] sm:$0xff]
    %v58 = vld [vmem:[%s1 + $0x68] sm:$0xff]
    %v59 = vld [vmem:[%s1 + $0x70] sm:$0xff]
    %v60 = vld [vmem:[%s1 + $0x78] sm:$0xff]
    %v61 = vld [vmem:[%s2] sm:$0x3]
    %v63 = vlaneseq
    %v64 = vshrl.u32 %v63, 7
    %v65 = vsub.s32 0, %v64
    %v66 = vrot.slane %v61, %v65
    %v67 = vlaneseq
    %v68 = vshrl.u32 %v67, 7
    %v69 = vsub.s32 1, %v68
    %v70 = vrot.slane %v61, %v69
    %v75 = vunpack.c.l.b16 %v43
    %v76 = vunpack.c.l.b16 %v44
    %v77 = vpack.c.b16 %v76, %v75
    %v95 = vunpack.c.l.b16 %v45
    %v96 = vunpack.c.h.b16 %v45
    %v97 = vunpack.c.l.b16 %v46
    %v98 = vunpack.c.h.b16 %v46
    %v99 = vunpack.c.l.b16 %v47
    %v100 = vunpack.c.h.b16 %v47
    %v101 = vunpack.c.l.b16 %v48
    %v102 = vunpack.c.h.b16 %v48
    %v103 = vunpack.c.l.b16 %v49
    %v104 = vunpack.c.h.b16 %v49
    %v105 = vunpack.c.l.b16 %v50
    %v106 = vunpack.c.h.b16 %v50
    %v107 = vunpack.c.l.b16 %v51
    %v108 = vunpack.c.h.b16 %v51
    %v109 = vunpack.c.l.b16 %v52
    %v110 = vunpack.c.h.b16 %v52
    %v111 = vunpack.c.l.b16 %v53
    %v112 = vunpack.c.h.b16 %v53
    %v113 = vunpack.c.l.b16 %v54
    %v114 = vunpack.c.h.b16 %v54
    %v115 = vunpack.c.l.b16 %v55
    %v116 = vunpack.c.h.b16 %v55
    %v117 = vunpack.c.l.b16 %v56
    %v118 = vunpack.c.h.b16 %v56
    %v119 = vunpack.c.l.b16 %v57
    %v120 = vunpack.c.h.b16 %v57
    %v121 = vunpack.c.l.b16 %v58
    %v122 = vunpack.c.h.b16 %v58
    %v123 = vunpack.c.l.b16 %v59
    %v124 = vunpack.c.h.b16 %v59
    %v125 = vunpack.c.l.b16 %v60
    %v126 = vunpack.c.h.b16 %v60
    %v127 = vpack.c.b16 %v97, %v95
    %v128 = vpack.c.b16 %v98, %v96
    %v129 = vpack.c.b16 %v101, %v99
    %v130 = vpack.c.b16 %v102, %v100
    %v131 = vpack.c.b16 %v105, %v103
    %v132 = vpack.c.b16 %v106, %v104
    %v133 = vpack.c.b16 %v109, %v107
    %v134 = vpack.c.b16 %v110, %v108
    %v135 = vpack.c.b16 %v113, %v111
    %v136 = vpack.c.b16 %v114, %v112
    %v137 = vpack.c.b16 %v117, %v115
    %v138 = vpack.c.b16 %v118, %v116
    %v139 = vpack.c.b16 %v121, %v119
    %v140 = vpack.c.b16 %v122, %v120
    %v141 = vpack.c.b16 %v125, %v123
    %v142 = vpack.c.b16 %v126, %v124
    %159 = vmatprep.subr.bf16.mxu0 %v128
    %160 = vmatpush1.bf16.msra.mxu0 %v127
    %161 = vmatprep.subr.bf16.mxu0 %v130
    %162 = vmatpush1.bf16.msra.mxu0 %v129
    %163 = vmatprep.subr.bf16.mxu0 %v132
    %164 = vmatpush1.bf16.msra.mxu0 %v131
    %165 = vmatprep.subr.bf16.mxu0 %v134
    %166 = vmatpush1.bf16.msra.mxu0 %v133
    %167 = vmatprep.subr.bf16.mxu0 %v136
    %168 = vmatpush1.bf16.msra.mxu0 %v135
    %169 = vmatprep.subr.bf16.mxu0 %v138
    %170 = vmatpush1.bf16.msra.mxu0 %v137
    %171 = vmatprep.subr.bf16.mxu0 %v140
    %172 = vmatpush1.bf16.msra.mxu0 %v139
    %173 = vmatprep.subr.bf16.mxu0 %v142
    %174 = vmatpush1.bf16.msra.mxu0 %v141
    %175 = vmatprep.subr.bf16.mxu0 0
    %176 = vmatpush1.bf16.msra.mxu0 0
    %177 = vmatprep.subr.bf16.mxu0 0
    %178 = vmatpush1.bf16.msra.mxu0 0
    %179 = vmatprep.subr.bf16.mxu0 0
    %180 = vmatpush1.bf16.msra.mxu0 0
    %181 = vmatprep.subr.bf16.mxu0 0
    %182 = vmatpush1.bf16.msra.mxu0 0
    %183 = vmatprep.subr.bf16.mxu0 0
    %184 = vmatpush1.bf16.msra.mxu0 0
    %185 = vmatprep.subr.bf16.mxu0 0
    %186 = vmatpush1.bf16.msra.mxu0 0
    %187 = vmatprep.subr.bf16.mxu0 0
    %188 = vmatpush1.bf16.msra.mxu0 0
    %189 = vmatprep.subr.bf16.mxu0 0
    %190 = vmatpush1.bf16.msra.mxu0 0
    %191 = vmatprep.mubr.bf16.mxu0 0
    %192 = vmatmul.mubr.bf16.gmra.mrb[0].mxu0 %v77
    %v193 = vpop.f32.mrb[0].mxu0
    %v194 = vadd.f32 %v66, %v193
    %v195 = vpop.f32.mrb[0].mxu0
    %v196 = vadd.f32 %v70, %v195
    %v197 = vpop.f32.mrb[0].mxu0
    %v198 = vadd.f32 %v66, %v197
    %v199 = vpop.f32.mrb[0].mxu0
    %v200 = vadd.f32 %v70, %v199
    %201 = vdwg.mxu0
    %v202 = vmax.f32 %v194, 0.0
    %v203 = vmax.f32 %v196, 0.0
    %v204 = vmax.f32 %v198, 0.0
    %v205 = vmax.f32 %v200, 0.0
    %v206 = vpack.c.bf16 %v204, %v202
    %v207 = vpack.c.bf16 %v205, %v203
    %v208 = vld [vmem:[#allocation3] sm:$0xf]
    %v209 = vld [vmem:[#allocation3 + $0x4] sm:$0xf]
    %v210 = vld [vmem:[#allocation3 + $0x8] sm:$0xf]
    %v211 = vld [vmem:[#allocation3 + $0xc] sm:$0xf]
    %v212 = vld [vmem:[#allocation3 + $0x10] sm:$0xf]
    %v213 = vld [vmem:[#allocation3 + $0x14] sm:$0xf]
    %v214 = vld [vmem:[#allocation3 + $0x18] sm:$0xf]
    %v215 = vld [vmem:[#allocation3 + $0x1c] sm:$0xf]
    %v216 = vld [vmem:[#allocation3 + $0x20] sm:$0xf]
    %v217 = vld [vmem:[#allocation3 + $0x24] sm:$0xf]
    %v218 = vld [vmem:[#allocation3 + $0x28] sm:$0xf]
    %v219 = vld [vmem:[#allocation3 + $0x2c] sm:$0xf]
    %v220 = vld [vmem:[#allocation3 + $0x30] sm:$0xf]
    %v221 = vld [vmem:[#allocation3 + $0x34] sm:$0xf]
    %v222 = vld [vmem:[#allocation3 + $0x38] sm:$0xf]
    %v223 = vld [vmem:[#allocation3 + $0x3c] sm:$0xf]
    %v224 = vld [vmem:[#allocation3 + $0x40] sm:$0xf]
    %v225 = vld [vmem:[#allocation3 + $0x44] sm:$0xf]
    %v226 = vld [vmem:[#allocation3 + $0x48] sm:$0xf]
    %v227 = vld [vmem:[#allocation3 + $0x4c] sm:$0xf]
    %v228 = vld [vmem:[#allocation3 + $0x50] sm:$0xf]
    %v229 = vld [vmem:[#allocation3 + $0x54] sm:$0xf]
    %v230 = vld [vmem:[#allocation3 + $0x58] sm:$0xf]
    %v231 = vld [vmem:[#allocation3 + $0x5c] sm:$0xf]
    %v232 = vld [vmem:[#allocation3 + $0x60] sm:$0xf]
    %v233 = vld [vmem:[#allocation3 + $0x64] sm:$0xf]
    %v234 = vld [vmem:[#allocation3 + $0x68] sm:$0xf]
    %v235 = vld [vmem:[#allocation3 + $0x6c] sm:$0xf]
    %v236 = vld [vmem:[#allocation3 + $0x70] sm:$0xf]
    %v237 = vld [vmem:[#allocation3 + $0x74] sm:$0xf]
    %v238 = vld [vmem:[#allocation3 + $0x78] sm:$0xf]
    %v239 = vld [vmem:[#allocation3 + $0x7c] sm:$0xf]
    %v240 = vld [vmem:[%s4] sm:$0x1]
    %v242 = vlaneseq
    %v243 = vshrl.u32 %v242, 7
    %v244 = vsub.s32 0, %v243
    %v245 = vrot.slane %v240, %v244
    %v279 = vunpack.c.l.b16 %v208
    %v280 = vunpack.c.l.b16 %v209
    %v281 = vunpack.c.l.b16 %v210
    %v282 = vunpack.c.l.b16 %v211
    %v283 = vunpack.c.l.b16 %v212
    %v284 = vunpack.c.l.b16 %v213
    %v285 = vunpack.c.l.b16 %v214
    %v286 = vunpack.c.l.b16 %v215
    %v287 = vunpack.c.l.b16 %v216
    %v288 = vunpack.c.l.b16 %v217
    %v289 = vunpack.c.l.b16 %v218
    %v290 = vunpack.c.l.b16 %v219
    %v291 = vunpack.c.l.b16 %v220
    %v292 = vunpack.c.l.b16 %v221
    %v293 = vunpack.c.l.b16 %v222
    %v294 = vunpack.c.l.b16 %v223
    %v295 = vunpack.c.l.b16 %v224
    %v296 = vunpack.c.l.b16 %v225
    %v297 = vunpack.c.l.b16 %v226
    %v298 = vunpack.c.l.b16 %v227
    %v299 = vunpack.c.l.b16 %v228
    %v300 = vunpack.c.l.b16 %v229
    %v301 = vunpack.c.l.b16 %v230
    %v302 = vunpack.c.l.b16 %v231
    %v303 = vunpack.c.l.b16 %v232
    %v304 = vunpack.c.l.b16 %v233
    %v305 = vunpack.c.l.b16 %v234
    %v306 = vunpack.c.l.b16 %v235
    %v307 = vunpack.c.l.b16 %v236
    %v308 = vunpack.c.l.b16 %v237
    %v309 = vunpack.c.l.b16 %v238
    %v310 = vunpack.c.l.b16 %v239
    %v311 = vpack.c.b16 %v280, %v279
    %v312 = vpack.c.b16 %v282, %v281
    %v313 = vpack.c.b16 %v284, %v283
    %v314 = vpack.c.b16 %v286, %v285
    %v315 = vpack.c.b16 %v288, %v287
    %v316 = vpack.c.b16 %v290, %v289
    %v317 = vpack.c.b16 %v292, %v291
    %v318 = vpack.c.b16 %v294, %v293
    %v319 = vpack.c.b16 %v296, %v295
    %v320 = vpack.c.b16 %v298, %v297
    %v321 = vpack.c.b16 %v300, %v299
    %v322 = vpack.c.b16 %v302, %v301
    %v323 = vpack.c.b16 %v304, %v303
    %v324 = vpack.c.b16 %v306, %v305
    %v325 = vpack.c.b16 %v308, %v307
    %v326 = vpack.c.b16 %v310, %v309
    %343 = vmatprep.subr.bf16.mxu0 0
    %344 = vmatpush1.bf16.msra.mxu0 %v311
    %345 = vmatprep.subr.bf16.mxu0 0
    %346 = vmatpush1.bf16.msra.mxu0 %v312
    %347 = vmatprep.subr.bf16.mxu0 0
    %348 = vmatpush1.bf16.msra.mxu0 %v313
    %349 = vmatprep.subr.bf16.mxu0 0
    %350 = vmatpush1.bf16.msra.mxu0 %v314
    %351 = vmatprep.subr.bf16.mxu0 0
    %352 = vmatpush1.bf16.msra.mxu0 %v315
    %353 = vmatprep.subr.bf16.mxu0 0
    %354 = vmatpush1.bf16.msra.mxu0 %v316
    %355 = vmatprep.subr.bf16.mxu0 0
    %356 = vmatpush1.bf16.msra.mxu0 %v317
    %357 = vmatprep.subr.bf16.mxu0 0
    %358 = vmatpush1.bf16.msra.mxu0 %v318
    %359 = vmatprep.subr.bf16.mxu0 0
    %360 = vmatpush1.bf16.msra.mxu0 %v319
    %361 = vmatprep.subr.bf16.mxu0 0
    %362 = vmatpush1.bf16.msra.mxu0 %v320
    %363 = vmatprep.subr.bf16.mxu0 0
    %364 = vmatpush1.bf16.msra.mxu0 %v321
    %365 = vmatprep.subr.bf16.mxu0 0
    %366 = vmatpush1.bf16.msra.mxu0 %v322
    %367 = vmatprep.subr.bf16.mxu0 0
    %368 = vmatpush1.bf16.msra.mxu0 %v323
    %369 = vmatprep.subr.bf16.mxu0 0
    %370 = vmatpush1.bf16.msra.mxu0 %v324
    %371 = vmatprep.subr.bf16.mxu0 0
    %372 = vmatpush1.bf16.msra.mxu0 %v325
    %373 = vmatprep.subr.bf16.mxu0 0
    %374 = vmatpush1.bf16.msra.mxu0 %v326
    %375 = vmatprep.mubr.bf16.mxu0 %v207
    %376 = vmatmul.mubr.bf16.gmra.mrb[0].mxu0 %v206
    %v377 = vpop.f32.mrb[0].mxu0
    %v378 = vadd.f32 %v245, %v377
    %v379 = vpop.f32.mrb[0].mxu0
    %v380 = vpop.f32.mrb[0].mxu0
    %v381 = vadd.f32 %v245, %v380
    %v382 = vpop.f32.mrb[0].mxu0
    %383 = vdwg.mxu0
    %v384 = vmax.f32 %v378, 0.0
    %v385 = vmax.f32 %v381, 0.0
    %v386 = vld [vmem:[%s5] sm:$0x1]
    %v388 = vlaneseq
    %v389 = vshrl.u32 %v388, 7
    %v390 = vsub.s32 0, %v389
    %v391 = vrot.slane %v386, %v390
    %v393 = vmul.f32 %v384, %v391
    %v394 = vmul.f32 %v385, %v391
    %395 = vadd.xlane.f32.xlu0 %v393
    %v396 = vpop.xlane.xlu0 %395
    %397 = vadd.xlane.f32.xlu0 %v394
    %v398 = vpop.xlane.xlu0 %397
    %s399 = sld [smem:[#allocation2]]
    %v400 = vstv %s399
    %v401 = vadd.f32 %v396, %v400
    %v402 = vadd.f32 %v398, %v400
    %v405 = vlaneseq
    %v406 = vand.u32 %v405, 127
    %v407 = vlaneseq
    %v408 = vshrl.u32 %v407, 7
    %v409 = vsub.s32 %v406, %v408
    %v410 = vrot.slane %v401, %v409
    %v411 = vadd.s32 %v406, 4294967288
    %v412 = vlaneseq
    %v413 = vshrl.u32 %v412, 7
    %v414 = vsub.s32 %v411, %v413
    %v415 = vrot.slane %v402, %v414
    %vm416 = vcmask 130112
    %v417 = vsel %vm416, %v415, %v410
    %vm419 = vcmask 122880
    %420 = vst.msk [vmem:[#allocation6] sm:$0x1] %vm419, %v417
    // Predicated region
    $region34: #{drillnet_forward.1} parent=1 // pred_check
      _
    $region35: #{drillnet_forward.1} parent=1 // pred_check_branch
      %422 = sbr.rel (0) target = $region37
    $region36: #{drillnet_forward.1} parent=1 // pred_region
      %s424 = ssub.s32 16, 16
      %425 = vsyncadd [#allocation5], %s424
      %s427 = sshll.u32 [#allocation6], 4
      %s428 = int_to_ptr.vmem [resolvable:$true] %s427
      %430 = dma.vmem_to_hbm [thread:$0]  %s428, 16, %s7, [#allocation5]
    $region37: #{drillnet_forward.1} parent=1 // pred_fallthru
      _
    // Predicated region
    $region38: #{drillnet_forward.1} parent=1 // pred_check
      _
    $region39: #{drillnet_forward.1} parent=1 // pred_check_branch
      %432 = sbr.rel (0) target = $region41
    $region40: #{drillnet_forward.1} parent=1 // pred_region
      %433 = dma.done [#allocation5], 16
    $region41: #{drillnet_forward.1} parent=1 // pred_fallthru
      _
    %434 = vsyncpa [#allocation4], 1
    %435 = vsyncpa [#allocation5], 1

</llo_original>
